<compile_context>
chip_gen: v5e
topology: v5e:2x2
jax: 0.10.0
libtpu: 0.0.40
codegen_flags: <defaults>
</compile_context>

<pallas_src>
import jax
import jax.numpy as jnp
from jax import lax
from jax.experimental import pallas as pl
from jax.experimental.pallas import tpu as pltpu

OBJ = 3
DIM = 2
DOF = OBJ * DIM           # 6
NSTATE = 2 * DOF          # 12
M = tuple(1.0 for _ in range(OBJ))   # self.m = [1]*obj
K = 1.0                              # self.k = 1  (g = 9.8 and self.l unused in forward())

LANE = 128
SUB = 8
S_MAX = 512               # 12 * 512 * 128 * 4 B = 3 MiB per block


def body3_kernel(z_ref, out_ref):
    # z_ref / out_ref: (NSTATE, S, 128). Component c is the dense (S, 128) tile z_ref[c];
    # lanes = batch, sublanes = batch -> full vreg occupancy, unmasked full-tile stores.
    q = [z_ref[c] for c in range(DOF)]

    # dq/dt = dH/dp = p_i / m_i   (multiply skipped at trace time when m_i == 1)
    for i in range(OBJ):
        for d in range(DIM):
            c = 2 * i + d
            p_c = z_ref[DOF + c]
            v = p_c if M[i] == 1.0 else p_c * (1.0 / M[i])
            out_ref[c] = v.astype(out_ref.dtype)

    # dp/dt = -dH/dq from U = -sum_{i>j} k m_i m_j / r_ij  (pairs unrolled at trace time).
    acc_x = [None] * OBJ   # accumulate dp/dt directly (no final negate)
    acc_y = [None] * OBJ

    def _add(cur, val):
        return val if cur is None else cur + val

    def _sub(cur, val):
        return (-val) if cur is None else cur - val

    for i in range(OBJ):
        for j in range(i):
            dx = q[2 * i] - q[2 * j]
            dy = q[2 * i + 1] - q[2 * j + 1]
            r2 = dx * dx + dy * dy          # pure VPU, no cross-lane reduce
            inv_r = lax.rsqrt(r2)           # single EUP op (vs log+exp for **-1.5)
            inv_r3 = inv_r * inv_r * inv_r
            gx = dx * inv_r3                # = dU/dq_{i,x} contribution of pair (i,j)
            gy = dy * inv_r3
            coef = K * M[i] * M[j]
            if coef != 1.0:                 # trace-time: skip multiply-by-1
                gx = coef * gx
                gy = coef * gy
            acc_x[i] = _sub(acc_x[i], gx)   # dp_i/dt -= dU/dq_i
            acc_y[i] = _sub(acc_y[i], gy)
            acc_x[j] = _add(acc_x[j], gx)   # dp_j/dt += (reaction)
            acc_y[j] = _add(acc_y[j], gy)

    for i in range(OBJ):
        out_ref[DOF + 2 * i] = acc_x[i].astype(out_ref.dtype)
        out_ref[DOF + 2 * i + 1] = acc_y[i].astype(out_ref.dtype)


def _round_up(x, n):
    return ((x + n - 1) // n) * n


def _pick_tiling(n128):
    """Choose sublane tile S and grid size for the (12, n128, 128) SoA array."""
    if n128 <= 2 * SUB:
        return n128, 1                      # single block; S == full dim (8-divisibility waived)
    # even number of blocks (>= 2) so the grid shards cleanly across v7x's two TCs,
    # each block capped at S_MAX sublanes (~3 MiB) to stay within v7x VMEM budget.
    n_blocks = max(2, 2 * ((n128 + 2 * S_MAX - 1) // (2 * S_MAX)))
    s = min(S_MAX, _round_up(-(-n128 // n_blocks), SUB))
    return s, -(-n128 // s)


def body3_forward_soa(z):
    """dz/dt for state z in structure-of-arrays layout (NSTATE, batch) = (12, N)."""
    ns, n = z.shape
    assert ns == NSTATE
    n_pad = _round_up(n, LANE)
    if n_pad != n:
        # Edge replication keeps padded lanes physically valid (no r=0 -> inf/nan);
        # <=127 extra columns, fuses with whatever op produced z.
        z = jnp.pad(z, ((0, 0), (0, n_pad - n)), mode="edge")
    n128 = n_pad // LANE
    z3 = z.reshape(NSTATE, n128, LANE)      # free row-major reshape
    s, grid_n = _pick_tiling(n128)

    out3 = pl.pallas_call(
        body3_kernel,
        out_shape=jax.ShapeDtypeStruct((NSTATE, n128, LANE), z.dtype),
        grid_spec=pltpu.PrefetchScalarGridSpec(
            num_scalar_prefetch=0,
            grid=(grid_n,),
            in_specs=[pl.BlockSpec((NSTATE, s, LANE), lambda i: (0, i, 0))],
            out_specs=pl.BlockSpec((NSTATE, s, LANE), lambda i: (0, i, 0)),
        ),
        compiler_params=pltpu.CompilerParams(
            dimension_semantics=("parallel",),
            vmem_limit_bytes=32 * 1024 * 1024,
        ),
    )(z3)
    return out3.reshape(NSTATE, n_pad)[:, :n]


def body3_forward(coords):
    """Torch-interface parity: coords (bs, 12) -> dz/dt (bs, 12).

    The two transposes here are interface cost only; callers that keep the state in SoA
    (12, bs) layout end-to-end should call body3_forward_soa directly and avoid both
    extra HBM passes.
    """
    bs, ns = coords.shape
    assert ns == NSTATE
    return body3_forward_soa(coords.T).T


# ---------- pure-JAX reference (autograd of H, mirrors the torch forward) ----------
def _hamiltonian(z):
    q, p = z[:DOF], z[DOF:]
    T = 0.0
    for i in range(OBJ):
        T = T + 0.5 * jnp.sum(p[2 * i:2 * i + 2] ** 2) / M[i]
    U = 0.0
    for i in range(OBJ):
        for j in range(i):
            r = ((q[2 * i] - q[2 * j]) ** 2 + (q[2 * i + 1] - q[2 * j + 1]) ** 2) ** 0.5
            U = U - K * M[i] * M[j] / r
    return T + U


def body3_ref(coords):
    grads = jax.vmap(jax.grad(_hamiltonian))(coords)
    dqH, dpH = grads[:, :DOF], grads[:, DOF:]
    return jnp.concatenate([dpH, -dqH], axis=1)


if __name__ == "__main__":
    key = jax.random.PRNGKey(0)
    bs = 4096  # multiple of 128 -> no padding; n128=32 -> S=16, grid=2 (even: both TCs on v7x)
    kq, kp = jax.random.split(key)
    # Bodies near a well-separated triangle (avoids r ~ 0), momenta O(1).
    base = jnp.array([0.0, 0.0, 2.5, 0.0, 0.0, 2.5], dtype=jnp.float32)
    q0 = base[None, :] + 0.3 * jax.random.normal(kq, (bs, DOF), dtype=jnp.float32)
    p0 = jax.random.normal(kp, (bs, DOF), dtype=jnp.float32)
    coords = jnp.concatenate([q0, p0], axis=1)     # (bs, 12)

    out = jax.block_until_ready(body3_forward(coords))
    ref = body3_ref(coords)

    assert out.shape == (bs, NSTATE)
    assert bool(jnp.all(jnp.isfinite(out)))
    assert jnp.allclose(out, ref, rtol=1e-4, atol=1e-4)
    print("KERNEL_OK")
</pallas_src>

<mosaic_0001>
module attributes {stable_mosaic.version = 11 : i64} {
  func.func @body3_kernel(%arg0: i32, %arg1: memref<12x16x128xf32, #tpu.memory_space<vmem>>, %arg2: memref<12x16x128xf32, #tpu.memory_space<vmem>>) attributes {dimension_semantics = [#tpu.dimension_semantics<parallel>], iteration_bounds = array<i64: 2>, scalar_prefetch = 0 : i64, scratch_operands = 0 : i64, tpu.core_type = #tpu.core_type<tc>, window_params = [{transform_indices = @transform_0, window_bounds = array<i64: 12, 16, 128>}, {transform_indices = @transform_1, window_bounds = array<i64: 12, 16, 128>}]} {
    %c0 = arith.constant 0 : index
    %c0_0 = arith.constant 0 : index
    %c0_1 = arith.constant 0 : index
    %0 = vector.load %arg1[%c0, %c0_0, %c0_1] : memref<12x16x128xf32, #tpu.memory_space<vmem>>, vector<1x16x128xf32>
    %1 = vector.shape_cast %0 : vector<1x16x128xf32> to vector<16x128xf32>
    %c1 = arith.constant 1 : index
    %c0_2 = arith.constant 0 : index
    %c0_3 = arith.constant 0 : index
    %2 = vector.load %arg1[%c1, %c0_2, %c0_3] : memref<12x16x128xf32, #tpu.memory_space<vmem>>, vector<1x16x128xf32>
    %3 = vector.shape_cast %2 : vector<1x16x128xf32> to vector<16x128xf32>
    %c2 = arith.constant 2 : index
    %c0_4 = arith.constant 0 : index
    %c0_5 = arith.constant 0 : index
    %4 = vector.load %arg1[%c2, %c0_4, %c0_5] : memref<12x16x128xf32, #tpu.memory_space<vmem>>, vector<1x16x128xf32>
    %5 = vector.shape_cast %4 : vector<1x16x128xf32> to vector<16x128xf32>
    %c3 = arith.constant 3 : index
    %c0_6 = arith.constant 0 : index
    %c0_7 = arith.constant 0 : index
    %6 = vector.load %arg1[%c3, %c0_6, %c0_7] : memref<12x16x128xf32, #tpu.memory_space<vmem>>, vector<1x16x128xf32>
    %7 = vector.shape_cast %6 : vector<1x16x128xf32> to vector<16x128xf32>
    %c4 = arith.constant 4 : index
    %c0_8 = arith.constant 0 : index
    %c0_9 = arith.constant 0 : index
    %8 = vector.load %arg1[%c4, %c0_8, %c0_9] : memref<12x16x128xf32, #tpu.memory_space<vmem>>, vector<1x16x128xf32>
    %9 = vector.shape_cast %8 : vector<1x16x128xf32> to vector<16x128xf32>
    %c5 = arith.constant 5 : index
    %c0_10 = arith.constant 0 : index
    %c0_11 = arith.constant 0 : index
    %10 = vector.load %arg1[%c5, %c0_10, %c0_11] : memref<12x16x128xf32, #tpu.memory_space<vmem>>, vector<1x16x128xf32>
    %11 = vector.shape_cast %10 : vector<1x16x128xf32> to vector<16x128xf32>
    %c6 = arith.constant 6 : index
    %c0_12 = arith.constant 0 : index
    %c0_13 = arith.constant 0 : index
    %12 = vector.load %arg1[%c6, %c0_12, %c0_13] : memref<12x16x128xf32, #tpu.memory_space<vmem>>, vector<1x16x128xf32>
    %13 = vector.shape_cast %12 : vector<1x16x128xf32> to vector<16x128xf32>
    %c0_14 = arith.constant 0 : index
    %c0_15 = arith.constant 0 : index
    %c0_16 = arith.constant 0 : index
    %14 = vector.load %arg2[%c0_14, %c0_15, %c0_16] : memref<12x16x128xf32, #tpu.memory_space<vmem>>, vector<1x16x128xf32>
    %15 = vector.shape_cast %14 : vector<1x16x128xf32> to vector<16x128xf32>
    %16 = vector.shape_cast %13 : vector<16x128xf32> to vector<1x16x128xf32>
    tpu.vector_store %arg2[%c0_14, %c0_15, %c0_16], %16 {strides = array<i32>} : memref<12x16x128xf32, #tpu.memory_space<vmem>>, vector<1x16x128xf32>,
    %c7 = arith.constant 7 : index
    %c0_17 = arith.constant 0 : index
    %c0_18 = arith.constant 0 : index
    %17 = vector.load %arg1[%c7, %c0_17, %c0_18] : memref<12x16x128xf32, #tpu.memory_space<vmem>>, vector<1x16x128xf32>
    %18 = vector.shape_cast %17 : vector<1x16x128xf32> to vector<16x128xf32>
    %c1_19 = arith.constant 1 : index
    %c0_20 = arith.constant 0 : index
    %c0_21 = arith.constant 0 : index
    %19 = vector.load %arg2[%c1_19, %c0_20, %c0_21] : memref<12x16x128xf32, #tpu.memory_space<vmem>>, vector<1x16x128xf32>
    %20 = vector.shape_cast %19 : vector<1x16x128xf32> to vector<16x128xf32>
    %21 = vector.shape_cast %18 : vector<16x128xf32> to vector<1x16x128xf32>
    tpu.vector_store %arg2[%c1_19, %c0_20, %c0_21], %21 {strides = array<i32>} : memref<12x16x128xf32, #tpu.memory_space<vmem>>, vector<1x16x128xf32>,
    %c8 = arith.constant 8 : index
    %c0_22 = arith.constant 0 : index
    %c0_23 = arith.constant 0 : index
    %22 = vector.load %arg1[%c8, %c0_22, %c0_23] : memref<12x16x128xf32, #tpu.memory_space<vmem>>, vector<1x16x128xf32>
    %23 = vector.shape_cast %22 : vector<1x16x128xf32> to vector<16x128xf32>
    %c2_24 = arith.constant 2 : index
    %c0_25 = arith.constant 0 : index
    %c0_26 = arith.constant 0 : index
    %24 = vector.load %arg2[%c2_24, %c0_25, %c0_26] : memref<12x16x128xf32, #tpu.memory_space<vmem>>, vector<1x16x128xf32>
    %25 = vector.shape_cast %24 : vector<1x16x128xf32> to vector<16x128xf32>
    %26 = vector.shape_cast %23 : vector<16x128xf32> to vector<1x16x128xf32>
    tpu.vector_store %arg2[%c2_24, %c0_25, %c0_26], %26 {strides = array<i32>} : memref<12x16x128xf32, #tpu.memory_space<vmem>>, vector<1x16x128xf32>,
    %c9 = arith.constant 9 : index
    %c0_27 = arith.constant 0 : index
    %c0_28 = arith.constant 0 : index
    %27 = vector.load %arg1[%c9, %c0_27, %c0_28] : memref<12x16x128xf32, #tpu.memory_space<vmem>>, vector<1x16x128xf32>
    %28 = vector.shape_cast %27 : vector<1x16x128xf32> to vector<16x128xf32>
    %c3_29 = arith.constant 3 : index
    %c0_30 = arith.constant 0 : index
    %c0_31 = arith.constant 0 : index
    %29 = vector.load %arg2[%c3_29, %c0_30, %c0_31] : memref<12x16x128xf32, #tpu.memory_space<vmem>>, vector<1x16x128xf32>
    %30 = vector.shape_cast %29 : vector<1x16x128xf32> to vector<16x128xf32>
    %31 = vector.shape_cast %28 : vector<16x128xf32> to vector<1x16x128xf32>
    tpu.vector_store %arg2[%c3_29, %c0_30, %c0_31], %31 {strides = array<i32>} : memref<12x16x128xf32, #tpu.memory_space<vmem>>, vector<1x16x128xf32>,
    %c10 = arith.constant 10 : index
    %c0_32 = arith.constant 0 : index
    %c0_33 = arith.constant 0 : index
    %32 = vector.load %arg1[%c10, %c0_32, %c0_33] : memref<12x16x128xf32, #tpu.memory_space<vmem>>, vector<1x16x128xf32>
    %33 = vector.shape_cast %32 : vector<1x16x128xf32> to vector<16x128xf32>
    %c4_34 = arith.constant 4 : index
    %c0_35 = arith.constant 0 : index
    %c0_36 = arith.constant 0 : index
    %34 = vector.load %arg2[%c4_34, %c0_35, %c0_36] : memref<12x16x128xf32, #tpu.memory_space<vmem>>, vector<1x16x128xf32>
    %35 = vector.shape_cast %34 : vector<1x16x128xf32> to vector<16x128xf32>
    %36 = vector.shape_cast %33 : vector<16x128xf32> to vector<1x16x128xf32>
    tpu.vector_store %arg2[%c4_34, %c0_35, %c0_36], %36 {strides = array<i32>} : memref<12x16x128xf32, #tpu.memory_space<vmem>>, vector<1x16x128xf32>,
    %c11 = arith.constant 11 : index
    %c0_37 = arith.constant 0 : index
    %c0_38 = arith.constant 0 : index
    %37 = vector.load %arg1[%c11, %c0_37, %c0_38] : memref<12x16x128xf32, #tpu.memory_space<vmem>>, vector<1x16x128xf32>
    %38 = vector.shape_cast %37 : vector<1x16x128xf32> to vector<16x128xf32>
    %c5_39 = arith.constant 5 : index
    %c0_40 = arith.constant 0 : index
    %c0_41 = arith.constant 0 : index
    %39 = vector.load %arg2[%c5_39, %c0_40, %c0_41] : memref<12x16x128xf32, #tpu.memory_space<vmem>>, vector<1x16x128xf32>
    %40 = vector.shape_cast %39 : vector<1x16x128xf32> to vector<16x128xf32>
    %41 = vector.shape_cast %38 : vector<16x128xf32> to vector<1x16x128xf32>
    tpu.vector_store %arg2[%c5_39, %c0_40, %c0_41], %41 {strides = array<i32>} : memref<12x16x128xf32, #tpu.memory_space<vmem>>, vector<1x16x128xf32>,
    %42 = arith.subf %5, %1 : vector<16x128xf32>
    %43 = arith.subf %7, %3 : vector<16x128xf32>
    %44 = arith.mulf %42, %42 : vector<16x128xf32>
    %45 = arith.mulf %43, %43 : vector<16x128xf32>
    %46 = arith.addf %44, %45 : vector<16x128xf32>
    %47 = math.rsqrt %46 : vector<16x128xf32>
    %48 = arith.mulf %47, %47 : vector<16x128xf32>
    %49 = arith.mulf %48, %47 : vector<16x128xf32>
    %50 = arith.mulf %42, %49 : vector<16x128xf32>
    %51 = arith.mulf %43, %49 : vector<16x128xf32>
    %cst = arith.constant 0.000000e+00 : f32
    %52 = vector.broadcast %cst : f32 to vector<16x128xf32>
    %53 = arith.subf %52, %50 : vector<16x128xf32>
    %cst_42 = arith.constant 0.000000e+00 : f32
    %54 = vector.broadcast %cst_42 : f32 to vector<16x128xf32>
    %55 = arith.subf %54, %51 : vector<16x128xf32>
    %56 = arith.subf %9, %1 : vector<16x128xf32>
    %57 = arith.subf %11, %3 : vector<16x128xf32>
    %58 = arith.mulf %56, %56 : vector<16x128xf32>
    %59 = arith.mulf %57, %57 : vector<16x128xf32>
    %60 = arith.addf %58, %59 : vector<16x128xf32>
    %61 = math.rsqrt %60 : vector<16x128xf32>
    %62 = arith.mulf %61, %61 : vector<16x128xf32>
    %63 = arith.mulf %62, %61 : vector<16x128xf32>
    %64 = arith.mulf %56, %63 : vector<16x128xf32>
    %65 = arith.mulf %57, %63 : vector<16x128xf32>
    %cst_43 = arith.constant 0.000000e+00 : f32
    %66 = vector.broadcast %cst_43 : f32 to vector<16x128xf32>
    %67 = arith.subf %66, %64 : vector<16x128xf32>
    %cst_44 = arith.constant 0.000000e+00 : f32
    %68 = vector.broadcast %cst_44 : f32 to vector<16x128xf32>
    %69 = arith.subf %68, %65 : vector<16x128xf32>
    %70 = arith.addf %50, %64 : vector<16x128xf32>
    %71 = arith.addf %51, %65 : vector<16x128xf32>
    %72 = arith.subf %9, %5 : vector<16x128xf32>
    %73 = arith.subf %11, %7 : vector<16x128xf32>
    %74 = arith.mulf %72, %72 : vector<16x128xf32>
    %75 = arith.mulf %73, %73 : vector<16x128xf32>
    %76 = arith.addf %74, %75 : vector<16x128xf32>
    %77 = math.rsqrt %76 : vector<16x128xf32>
    %78 = arith.mulf %77, %77 : vector<16x128xf32>
    %79 = arith.mulf %78, %77 : vector<16x128xf32>
    %80 = arith.mulf %72, %79 : vector<16x128xf32>
    %81 = arith.mulf %73, %79 : vector<16x128xf32>
    %82 = arith.subf %67, %80 : vector<16x128xf32>
    %83 = arith.subf %69, %81 : vector<16x128xf32>
    %84 = arith.addf %53, %80 : vector<16x128xf32>
    %85 = arith.addf %55, %81 : vector<16x128xf32>
    %c6_45 = arith.constant 6 : index
    %c0_46 = arith.constant 0 : index
    %c0_47 = arith.constant 0 : index
    %86 = vector.load %arg2[%c6_45, %c0_46, %c0_47] : memref<12x16x128xf32, #tpu.memory_space<vmem>>, vector<1x16x128xf32>
    %87 = vector.shape_cast %86 : vector<1x16x128xf32> to vector<16x128xf32>
    %88 = vector.shape_cast %70 : vector<16x128xf32> to vector<1x16x128xf32>
    tpu.vector_store %arg2[%c6_45, %c0_46, %c0_47], %88 {strides = array<i32>} : memref<12x16x128xf32, #tpu.memory_space<vmem>>, vector<1x16x128xf32>,
    %c7_48 = arith.constant 7 : index
    %c0_49 = arith.constant 0 : index
    %c0_50 = arith.constant 0 : index
    %89 = vector.load %arg2[%c7_48, %c0_49, %c0_50] : memref<12x16x128xf32, #tpu.memory_space<vmem>>, vector<1x16x128xf32>
    %90 = vector.shape_cast %89 : vector<1x16x128xf32> to vector<16x128xf32>
    %91 = vector.shape_cast %71 : vector<16x128xf32> to vector<1x16x128xf32>
    tpu.vector_store %arg2[%c7_48, %c0_49, %c0_50], %91 {strides = array<i32>} : memref<12x16x128xf32, #tpu.memory_space<vmem>>, vector<1x16x128xf32>,
    %c8_51 = arith.constant 8 : index
    %c0_52 = arith.constant 0 : index
    %c0_53 = arith.constant 0 : index
    %92 = vector.load %arg2[%c8_51, %c0_52, %c0_53] : memref<12x16x128xf32, #tpu.memory_space<vmem>>, vector<1x16x128xf32>
    %93 = vector.shape_cast %92 : vector<1x16x128xf32> to vector<16x128xf32>
    %94 = vector.shape_cast %84 : vector<16x128xf32> to vector<1x16x128xf32>
    tpu.vector_store %arg2[%c8_51, %c0_52, %c0_53], %94 {strides = array<i32>} : memref<12x16x128xf32, #tpu.memory_space<vmem>>, vector<1x16x128xf32>,
    %c9_54 = arith.constant 9 : index
    %c0_55 = arith.constant 0 : index
    %c0_56 = arith.constant 0 : index
    %95 = vector.load %arg2[%c9_54, %c0_55, %c0_56] : memref<12x16x128xf32, #tpu.memory_space<vmem>>, vector<1x16x128xf32>
    %96 = vector.shape_cast %95 : vector<1x16x128xf32> to vector<16x128xf32>
    %97 = vector.shape_cast %85 : vector<16x128xf32> to vector<1x16x128xf32>
    tpu.vector_store %arg2[%c9_54, %c0_55, %c0_56], %97 {strides = array<i32>} : memref<12x16x128xf32, #tpu.memory_space<vmem>>, vector<1x16x128xf32>,
    %c10_57 = arith.constant 10 : index
    %c0_58 = arith.constant 0 : index
    %c0_59 = arith.constant 0 : index
    %98 = vector.load %arg2[%c10_57, %c0_58, %c0_59] : memref<12x16x128xf32, #tpu.memory_space<vmem>>, vector<1x16x128xf32>
    %99 = vector.shape_cast %98 : vector<1x16x128xf32> to vector<16x128xf32>
    %100 = vector.shape_cast %82 : vector<16x128xf32> to vector<1x16x128xf32>
    tpu.vector_store %arg2[%c10_57, %c0_58, %c0_59], %100 {strides = array<i32>} : memref<12x16x128xf32, #tpu.memory_space<vmem>>, vector<1x16x128xf32>,
    %c11_60 = arith.constant 11 : index
    %c0_61 = arith.constant 0 : index
    %c0_62 = arith.constant 0 : index
    %101 = vector.load %arg2[%c11_60, %c0_61, %c0_62] : memref<12x16x128xf32, #tpu.memory_space<vmem>>, vector<1x16x128xf32>
    %102 = vector.shape_cast %101 : vector<1x16x128xf32> to vector<16x128xf32>
    %103 = vector.shape_cast %83 : vector<16x128xf32> to vector<1x16x128xf32>
    tpu.vector_store %arg2[%c11_60, %c0_61, %c0_62], %103 {strides = array<i32>} : memref<12x16x128xf32, #tpu.memory_space<vmem>>, vector<1x16x128xf32>,
    return
  }
  func.func @transform_0(%arg0: i32) -> (i32, i32, i32) {
    %c0_i32 = arith.constant 0 : i32
    %c0_i32_0 = arith.constant 0 : i32
    %c0_i32_1 = arith.constant 0 : i32
    return %c0_i32, %arg0, %c0_i32_0 : i32, i32, i32
  }
  func.func @transform_1(%arg0: i32) -> (i32, i32, i32) {
    %c0_i32 = arith.constant 0 : i32
    %c0_i32_0 = arith.constant 0 : i32
    %c0_i32_1 = arith.constant 0 : i32
    return %c0_i32, %arg0, %c0_i32_0 : i32, i32, i32
  }
}

</mosaic_0001>

<llo_original>
// kernel: tpu_custom_call.1
$region0: #{tpu_custom_call.1}
  #allocation0 [shape = 'u32[]', space=smem, size = 0x4, offset = 0x4, fixed_abs, tag = 'smem constant byte address 0x4 - core index']
  #allocation1 [shape = 'u32[72,128]{1,0:T(1,128)}', space=vmem, size = 0x9000, scoped, tag = 'internal scratch']
  #allocation6 [shape = 's32[]', space=sflag, size = 0x4, offset = 0, fixed_abs, tag = 'sflag constant byte address 0x0 - dummy sync flag']
  #allocation8 [shape = 's32[]', space=sflag, size = 0x4, offset = 0, fixed_abs, tag = 'sflag constant byte address 0x0 - dummy sync flag']
  %s0 = inlined_call_operand.hbm [shape: f32[12,32,128], index: 0, kind: input, shape index: {}]
  %s1 = inlined_call_operand.hbm [shape: f32[12,32,128], index: 1, kind: output, shape index: {}]
  %s2 = sld [smem:[#allocation0]]
  $region41: #{tpu_custom_call.1} parent=0
    _
  %s4 = ssub.s32 1, %s2
  %s5 = scalar_select 0, %s4, %s2
  $region1: #{tpu_custom_call.1} parent=0
    #allocation2 [shape = 'u8[196608]{0}', space=vmem, size = 0x30000, scoped, tag = 'input window, operand 0']
    #allocation3 [shape = 's32[2]{0}', space=sflag, size = 0x8, scoped, tag = 'scoped memory for tpu_custom_call.1']
    #allocation4 [shape = 's32[2]{0}', space=sflag, size = 0x8, scoped, tag = 'scoped memory for tpu_custom_call.1']
    #allocation5 [shape = 'u8[196608]{0}', space=vmem, size = 0x30000, scoped, tag = 'output window, operand 0']
    %6 = vsyncpa [#allocation3], 0
    %s7 = scalar_lea.sflag [#allocation3], 1
    %8 = vsyncpa %s7, 0
    %9 = vsyncpa [#allocation4], 0
    %s10 = scalar_lea.sflag [#allocation4], 1
    %11 = vsyncpa %s10, 0
    loop: start=0, step=1, limit=4
    $region2: #{tpu_custom_call.1} parent=1 // loop_pre_header
      _
    $region3: #{tpu_custom_call.1} parent=1 // loop_header
      %s13 = sphi 0, %s17
      %p14 = scmp.ge.s32.totalorder %s13, 4
      %s23 = sphi 0, %s25
      %s26 = sphi 0, %s23
      %s27 = sphi 0, %s26
      %s43 = sphi 0, %s27
      %s49 = sphi 0, %s51
      %s52 = sphi 0, %s49
      %s53 = sphi 0, %s52
      %s69 = sphi 0, %s53
    $region4: #{tpu_custom_call.1} parent=1 // loop_header_branch
      %16 = sbr.rel (%p14) target = $region8
    $region5: #{tpu_custom_call.1} parent=1 // loop_body
      %s18 = ssub.s32 %s13, 1
      %s19 = ssub.s32 %s13, 2
      %s20 = sadd.s32 %s13, 1
      %s21 = ssub.s32 %s13, %s20
      %p22 = scmp.eq.s32.totalorder %s21, 0
      %s24 = sadd.s32 %s23, 1
      %s25 = scalar_select %p22, %s23, %s24
      %p28 = pneg %p22
      %p29 = scmp.eq.s32.totalorder %s13, 1
      %p30 = por %p28, %p29
      %p31 = scmp.ne.s32.totalorder %s23, %s26
      %p32 = scmp.eq.s32.totalorder %s13, 0
      %p33 = por %p31, %p32
      %p34 = scmp.ne.s32.totalorder %s23, %s26
      %p35 = scmp.eq.s32.totalorder %s18, 1
      %p36 = por %p34, %p35
      %p37 = scmp.ne.s32.totalorder %s26, %s27
      %p38 = scmp.eq.s32.totalorder %s18, 0
      %p39 = por %p37, %p38
      %p40 = scmp.ne.s32.totalorder %s26, %s27
      %p41 = scmp.eq.s32.totalorder %s19, 1
      %p42 = por %p40, %p41
      %p44 = scmp.ne.s32.totalorder %s27, %s43
      %p45 = scmp.eq.s32.totalorder %s19, 0
      %p46 = por %p44, %p45
      %s47 = ssub.s32 %s13, %s20
      %p48 = scmp.eq.s32.totalorder %s47, 0
      %s50 = sadd.s32 %s49, 1
      %s51 = scalar_select %p48, %s49, %s50
      %p54 = pneg %p48
      %p55 = scmp.eq.s32.totalorder %s13, 1
      %p56 = por %p54, %p55
      %p57 = scmp.ne.s32.totalorder %s49, %s52
      %p58 = scmp.eq.s32.totalorder %s13, 0
      %p59 = por %p57, %p58
      %p60 = scmp.ne.s32.totalorder %s49, %s52
      %p61 = scmp.eq.s32.totalorder %s18, 1
      %p62 = por %p60, %p61
      %p63 = scmp.ne.s32.totalorder %s52, %s53
      %p64 = scmp.eq.s32.totalorder %s18, 0
      %p65 = por %p63, %p64
      %p66 = scmp.ne.s32.totalorder %s52, %s53
      %p67 = scmp.eq.s32.totalorder %s19, 1
      %p68 = por %p66, %p67
      %p70 = scmp.ne.s32.totalorder %s53, %s69
      %p71 = scmp.eq.s32.totalorder %s19, 0
      %p72 = por %p70, %p71
      %p73 = scmp.le.s32.totalorder 1, %s13
      %p74 = scmp.lt.s32.totalorder %s13, 3
      %p75 = pnand %p73, %p74
      %p76 = pneg %p75
      // Predicated region
      $region9: #{tpu_custom_call.1} parent=5 // pred_check
        _
      $region10: #{tpu_custom_call.1} parent=5 // pred_check_branch
        %78 = sbr.rel (%p75) target = $region12
      $region11: #{tpu_custom_call.1} parent=5 // pred_region
        %s79 = ssub.s32 %s13, 1
      $region12: #{tpu_custom_call.1} parent=5 // pred_fallthru
        _
      %p80 = scmp.lt.s32.totalorder %s13, 2
      // Predicated region
      $region13: #{tpu_custom_call.1} parent=5 // pred_check
        %p81 = pneg %p80
      $region14: #{tpu_custom_call.1} parent=5 // pred_check_branch
        %83 = sbr.rel (%p81) target = $region16
      $region15: #{tpu_custom_call.1} parent=5 // pred_region
        // Predicated region
        $region17: #{tpu_custom_call.1} parent=15 // pred_check
          %p84 = pneg %p33
        $region18: #{tpu_custom_call.1} parent=15 // pred_check_branch
          %86 = sbr.rel (%p84) target = $region20
        $region19: #{tpu_custom_call.1} parent=15 // pred_region
          #allocation7 [shape = 'u32[6]{0}', space=smem, size = 0x18, scoped, tag = 'DMA stride descriptor']
          %s87 = sand.u32 %s23, 1
          %s88 = scalar_lea.sflag [#allocation3], %s87
          %s89 = sand.u32 %s23, 1
          %s90 = smul.addr %s89, 192
          %s91 = scalar_lea.vmem [#allocation2], %s90
          %s92 = smul.u32 2, %s13
          %94 = vsyncadd %s88, 0
          %s95 = smul.addr %s92, 8
          %s96 = scalar_lea.hbm %s0, %s95
          %s98 = sshll.u32 1, 14
          %s99 = sxor.u32 4294967295, %s98
          %s101 = sld [smem:[#allocation0]]
          %s102 = sadd.s32 2, %s101
          %s104 = sshll.u32 7, 26
          %s105 = sxor.u32 4294967295, %s104
          %s106 = sand.u32 0, %s105
          %s107 = sshll.u32 %s102, 26
          %s108 = sor.u32 %s106, %s107
          %s109 = sshll.u32 %s96, 4
          %s110 = int_to_ptr.hbm [resolvable:$true] %s109
          %s111 = sshll.u32 %s91, 4
          %s112 = int_to_ptr.vmem [resolvable:$true] %s111
          %118 = sst [smem:[#allocation7]] 512
          %s119 = scalar_lea.smem [#allocation7], 1
          %120 = sst [smem:[%s119]] 256
          %s121 = scalar_lea.smem [#allocation7], 2
          %122 = sst [smem:[%s121]] 2
          %s123 = scalar_lea.smem [#allocation7], 3
          %124 = sst [smem:[%s123]] 128
          %s125 = scalar_lea.smem [#allocation7], 4
          %126 = sst [smem:[%s125]] 128
          %s127 = scalar_lea.smem [#allocation7], 5
          %128 = sst [smem:[%s127]] 8
          %130 = dma.general %s110, 3072, %s112, %s88, [#allocation6], [#allocation7], %s108, 0
        $region20: #{tpu_custom_call.1} parent=15 // pred_fallthru
          _
      $region16: #{tpu_custom_call.1} parent=5 // pred_fallthru
        _
      %p131 = scmp.le.s32.totalorder 1, %s13
      %p132 = scmp.lt.s32.totalorder %s13, 3
      %p133 = pnand %p131, %p132
      %p134 = pneg %p133
      // Predicated region
      $region21: #{tpu_custom_call.1} parent=5 // pred_check
        _
      $region22: #{tpu_custom_call.1} parent=5 // pred_check_branch
        %136 = sbr.rel (%p133) target = $region24
      $region23: #{tpu_custom_call.1} parent=5 // pred_region
        %s137 = ssub.s32 %s13, 1
        %s138 = sand.u32 %s26, 1
        %s139 = scalar_lea.sflag [#allocation3], %s138
        %s140 = sand.u32 %s26, 1
        %s141 = smul.addr %s140, 192
        %s142 = scalar_lea.vmem [#allocation2], %s141
        // Predicated region
        $region25: #{tpu_custom_call.1} parent=23 // pred_check
          %p143 = pneg %p39
        $region26: #{tpu_custom_call.1} parent=23 // pred_check_branch
          %145 = sbr.rel (%p143) target = $region28
        $region27: #{tpu_custom_call.1} parent=23 // pred_region
          %147 = dma.done %s139, 3072
        $region28: #{tpu_custom_call.1} parent=23 // pred_fallthru
          _
        %s148 = sand.u32 %s26, 1
        %s149 = scalar_lea.sflag [#allocation3], %s148
        %s150 = sand.u32 %s26, 1
        %s151 = smul.addr %s150, 192
        %s152 = scalar_lea.vmem [#allocation2], %s151
        %p153 = pneg %p39
        %p154 = pneg %p36
        %p155 = pneg %p65
        %p156 = pneg %p62
        %s157 = sand.u32 %s52, 1
        %s158 = scalar_lea.sflag [#allocation4], %s157
        %s159 = sand.u32 %s52, 1
        %s160 = smul.addr %s159, 192
        %s161 = scalar_lea.vmem [#allocation5], %s160
        %s162 = smul.u32 2, %s18
        %s163 = smul.u32 2, %s18
        %v164 = vld [vmem:[%s142] sm:$0xff]
        %v165 = vld [vmem:[%s142 + $0x8] sm:$0xff]
        %s166 = scalar_lea.vmem %s142, 16 [#allocation2]
        %v167 = vld [vmem:[%s166] sm:$0xff]
        %v168 = vld [vmem:[%s166 + $0x8] sm:$0xff]
        %s169 = scalar_lea.vmem %s142, 32 [#allocation2]
        %v170 = vld [vmem:[%s169] sm:$0xff]
        %v171 = vld [vmem:[%s169 + $0x8] sm:$0xff]
        %s172 = scalar_lea.vmem %s142, 48 [#allocation2]
        %v173 = vld [vmem:[%s172] sm:$0xff]
        %v174 = vld [vmem:[%s172 + $0x8] sm:$0xff]
        %s175 = scalar_lea.vmem %s142, 64 [#allocation2]
        %v176 = vld [vmem:[%s175] sm:$0xff]
        %v177 = vld [vmem:[%s175 + $0x8] sm:$0xff]
        %s178 = scalar_lea.vmem %s142, 80 [#allocation2]
        %v179 = vld [vmem:[%s178] sm:$0xff]
        %v180 = vld [vmem:[%s178 + $0x8] sm:$0xff]
        %s181 = scalar_lea.vmem %s142, 96 [#allocation2]
        %v182 = vld [vmem:[%s181] sm:$0xff]
        %v183 = vld [vmem:[%s181 + $0x8] sm:$0xff]
        %184 = vst [vmem:[%s161] sm:$0xff] %v182
        %185 = vst [vmem:[%s161 + $0x8] sm:$0xff] %v183
        %s186 = scalar_lea.vmem %s142, 112 [#allocation2]
        %v187 = vld [vmem:[%s186] sm:$0xff]
        %v188 = vld [vmem:[%s186 + $0x8] sm:$0xff]
        %s189 = scalar_lea.vmem %s161, 16 [#allocation5]
        %190 = vst [vmem:[%s189] sm:$0xff] %v187
        %191 = vst [vmem:[%s189 + $0x8] sm:$0xff] %v188
        %s192 = scalar_lea.vmem %s142, 128 [#allocation2]
        %v193 = vld [vmem:[%s192] sm:$0xff]
        %v194 = vld [vmem:[%s192 + $0x8] sm:$0xff]
        %s195 = scalar_lea.vmem %s161, 32 [#allocation5]
        %196 = vst [vmem:[%s195] sm:$0xff] %v193
        %197 = vst [vmem:[%s195 + $0x8] sm:$0xff] %v194
        %s198 = scalar_lea.vmem %s142, 144 [#allocation2]
        %v199 = vld [vmem:[%s198] sm:$0xff]
        %v200 = vld [vmem:[%s198 + $0x8] sm:$0xff]
        %s201 = scalar_lea.vmem %s161, 48 [#allocation5]
        %202 = vst [vmem:[%s201] sm:$0xff] %v199
        %203 = vst [vmem:[%s201 + $0x8] sm:$0xff] %v200
        %s204 = scalar_lea.vmem %s142, 160 [#allocation2]
        %v205 = vld [vmem:[%s204] sm:$0xff]
        %v206 = vld [vmem:[%s204 + $0x8] sm:$0xff]
        %s207 = scalar_lea.vmem %s161, 64 [#allocation5]
        %208 = vst [vmem:[%s207] sm:$0xff] %v205
        %209 = vst [vmem:[%s207 + $0x8] sm:$0xff] %v206
        %s210 = scalar_lea.vmem %s142, 176 [#allocation2]
        %v211 = vld [vmem:[%s210] sm:$0xff]
        %v212 = vld [vmem:[%s210 + $0x8] sm:$0xff]
        %s213 = scalar_lea.vmem %s161, 80 [#allocation5]
        %214 = vst [vmem:[%s213] sm:$0xff] %v211
        %215 = vst [vmem:[%s213 + $0x8] sm:$0xff] %v212
        %v216 = vsub.f32 %v170, %v164
        %v217 = vsub.f32 %v171, %v165
        %v218 = vsub.f32 %v173, %v167
        %v219 = vsub.f32 %v174, %v168
        %v220 = vmul.f32 %v216, %v216
        %v221 = vmul.f32 %v217, %v217
        %v222 = vmul.f32 %v218, %v218
        %v223 = vmul.f32 %v219, %v219
        %v224 = vadd.f32 %v220, %v222
        %v225 = vadd.f32 %v221, %v223
        %v226 = vrsqrt.pop %v224
        %v227 = vmul.f32 %v226, %v224
        %v228 = vmul.f32 %v227, %v226
        %v229 = vmul.f32 0.5, %v228
        %v230 = vsub.f32 1.5, %v229
        %v231 = vmul.f32 %v226, %v230
        %vm232 = vweird.f32 %v224
        %vm233 = vweird.f32 %v226
        %vm234 = vmor %vm232, %vm233
        %v235 = vsel %vm234, %v226, %v231
        %v236 = vrsqrt.pop %v225
        %v237 = vmul.f32 %v236, %v225
        %v238 = vmul.f32 %v237, %v236
        %v239 = vmul.f32 0.5, %v238
        %v240 = vsub.f32 1.5, %v239
        %v241 = vmul.f32 %v236, %v240
        %vm242 = vweird.f32 %v225
        %vm243 = vweird.f32 %v236
        %vm244 = vmor %vm242, %vm243
        %v245 = vsel %vm244, %v236, %v241
        %v246 = vmul.f32 %v235, %v235
        %v247 = vmul.f32 %v245, %v245
        %v248 = vmul.f32 %v246, %v235
        %v249 = vmul.f32 %v247, %v245
        %v250 = vmul.f32 %v216, %v248
        %v251 = vmul.f32 %v217, %v249
        %v252 = vmul.f32 %v218, %v248
        %v253 = vmul.f32 %v219, %v249
        %v254 = vsub.f32 0.0, %v250
        %v255 = vsub.f32 0.0, %v251
        %v256 = vsub.f32 0.0, %v252
        %v257 = vsub.f32 0.0, %v253
        %v258 = vsub.f32 %v176, %v164
        %v259 = vsub.f32 %v177, %v165
        %v260 = vsub.f32 %v179, %v167
        %v261 = vsub.f32 %v180, %v168
        %v262 = vmul.f32 %v258, %v258
        %v263 = vmul.f32 %v259, %v259
        %v264 = vmul.f32 %v260, %v260
        %v265 = vmul.f32 %v261, %v261
        %v266 = vadd.f32 %v262, %v264
        %v267 = vadd.f32 %v263, %v265
        %v268 = vrsqrt.pop %v266
        %v269 = vmul.f32 %v268, %v266
        %v270 = vmul.f32 %v269, %v268
        %v271 = vmul.f32 0.5, %v270
        %v272 = vsub.f32 1.5, %v271
        %v273 = vmul.f32 %v268, %v272
        %vm274 = vweird.f32 %v266
        %vm275 = vweird.f32 %v268
        %vm276 = vmor %vm274, %vm275
        %v277 = vsel %vm276, %v268, %v273
        %v278 = vrsqrt.pop %v267
        %v279 = vmul.f32 %v278, %v267
        %v280 = vmul.f32 %v279, %v278
        %v281 = vmul.f32 0.5, %v280
        %v282 = vsub.f32 1.5, %v281
        %v283 = vmul.f32 %v278, %v282
        %vm284 = vweird.f32 %v267
        %vm285 = vweird.f32 %v278
        %vm286 = vmor %vm284, %vm285
        %v287 = vsel %vm286, %v278, %v283
        %v288 = vmul.f32 %v277, %v277
        %v289 = vmul.f32 %v287, %v287
        %v290 = vmul.f32 %v288, %v277
        %v291 = vmul.f32 %v289, %v287
        %v292 = vmul.f32 %v258, %v290
        %v293 = vmul.f32 %v259, %v291
        %v294 = vmul.f32 %v260, %v290
        %v295 = vmul.f32 %v261, %v291
        %v296 = vsub.f32 0.0, %v292
        %v297 = vsub.f32 0.0, %v293
        %v298 = vsub.f32 0.0, %v294
        %v299 = vsub.f32 0.0, %v295
        %v300 = vadd.f32 %v250, %v292
        %v301 = vadd.f32 %v251, %v293
        %v302 = vadd.f32 %v252, %v294
        %v303 = vadd.f32 %v253, %v295
        %v304 = vsub.f32 %v176, %v170
        %v305 = vsub.f32 %v177, %v171
        %v306 = vsub.f32 %v179, %v173
        %v307 = vsub.f32 %v180, %v174
        %v308 = vmul.f32 %v304, %v304
        %v309 = vmul.f32 %v305, %v305
        %v310 = vmul.f32 %v306, %v306
        %v311 = vmul.f32 %v307, %v307
        %v312 = vadd.f32 %v308, %v310
        %v313 = vadd.f32 %v309, %v311
        %v314 = vrsqrt.pop %v312
        %v315 = vmul.f32 %v314, %v312
        %v316 = vmul.f32 %v315, %v314
        %v317 = vmul.f32 0.5, %v316
        %v318 = vsub.f32 1.5, %v317
        %v319 = vmul.f32 %v314, %v318
        %vm320 = vweird.f32 %v312
        %vm321 = vweird.f32 %v314
        %vm322 = vmor %vm320, %vm321
        %v323 = vsel %vm322, %v314, %v319
        %v324 = vrsqrt.pop %v313
        %v325 = vmul.f32 %v324, %v313
        %v326 = vmul.f32 %v325, %v324
        %v327 = vmul.f32 0.5, %v326
        %v328 = vsub.f32 1.5, %v327
        %v329 = vmul.f32 %v324, %v328
        %vm330 = vweird.f32 %v313
        %vm331 = vweird.f32 %v324
        %vm332 = vmor %vm330, %vm331
        %v333 = vsel %vm332, %v324, %v329
        %v334 = vmul.f32 %v323, %v323
        %v335 = vmul.f32 %v333, %v333
        %v336 = vmul.f32 %v334, %v323
        %v337 = vmul.f32 %v335, %v333
        %v338 = vmul.f32 %v304, %v336
        %v339 = vmul.f32 %v305, %v337
        %v340 = vmul.f32 %v306, %v336
        %v341 = vmul.f32 %v307, %v337
        %v342 = vsub.f32 %v296, %v338
        %v343 = vsub.f32 %v297, %v339
        %v344 = vsub.f32 %v298, %v340
        %v345 = vsub.f32 %v299, %v341
        %v346 = vadd.f32 %v254, %v338
        %v347 = vadd.f32 %v255, %v339
        %v348 = vadd.f32 %v256, %v340
        %v349 = vadd.f32 %v257, %v341
        %s350 = scalar_lea.vmem %s161, 96 [#allocation5]
        %351 = vst [vmem:[%s350] sm:$0xff] %v300
        %352 = vst [vmem:[%s350 + $0x8] sm:$0xff] %v301
        %s353 = scalar_lea.vmem %s161, 112 [#allocation5]
        %354 = vst [vmem:[%s353] sm:$0xff] %v302
        %355 = vst [vmem:[%s353 + $0x8] sm:$0xff] %v303
        %s356 = scalar_lea.vmem %s161, 128 [#allocation5]
        %357 = vst [vmem:[%s356] sm:$0xff] %v346
        %358 = vst [vmem:[%s356 + $0x8] sm:$0xff] %v347
        %s359 = scalar_lea.vmem %s161, 144 [#allocation5]
        %360 = vst [vmem:[%s359] sm:$0xff] %v348
        %361 = vst [vmem:[%s359 + $0x8] sm:$0xff] %v349
        %s362 = scalar_lea.vmem %s161, 160 [#allocation5]
        %363 = vst [vmem:[%s362] sm:$0xff] %v342
        %364 = vst [vmem:[%s362 + $0x8] sm:$0xff] %v343
        %s365 = scalar_lea.vmem %s161, 176 [#allocation5]
        %366 = vst [vmem:[%s365] sm:$0xff] %v344
        %367 = vst [vmem:[%s365 + $0x8] sm:$0xff] %v345
        %s368 = sand.u32 %s52, 1
        %s369 = scalar_lea.sflag [#allocation4], %s368
        %s370 = sand.u32 %s52, 1
        %s371 = smul.addr %s370, 192
        %s372 = scalar_lea.vmem [#allocation5], %s371
        // Predicated region
        $region29: #{tpu_custom_call.1} parent=23 // pred_check
          %p373 = pneg %p62
        $region30: #{tpu_custom_call.1} parent=23 // pred_check_branch
          %375 = sbr.rel (%p373) target = $region32
        $region31: #{tpu_custom_call.1} parent=23 // pred_region
          #allocation9 [shape = 'u32[6]{0}', space=smem, size = 0x18, scoped, tag = 'DMA stride descriptor']
          %s376 = smul.u32 2, %s18
          %378 = vsyncadd %s369, 0
          %s379 = smul.addr %s376, 8
          %s380 = scalar_lea.hbm %s1, %s379
          %s382 = sshll.u32 1, 14
          %s383 = sxor.u32 4294967295, %s382
          %s386 = sshll.u32 7, 18
          %s387 = sxor.u32 4294967295, %s386
          %s388 = sand.u32 0, %s387
          %s390 = sor.u32 %s388, 0
          %s391 = sshll.u32 %s372, 4
          %s392 = int_to_ptr.vmem [resolvable:$true] %s391
          %s393 = sshll.u32 %s380, 4
          %s394 = int_to_ptr.hbm [resolvable:$true] %s393
          %400 = sst [smem:[#allocation9]] 256
          %s401 = scalar_lea.smem [#allocation9], 1
          %402 = sst [smem:[%s401]] 512
          %s403 = scalar_lea.smem [#allocation9], 2
          %404 = sst [smem:[%s403]] 2
          %s405 = scalar_lea.smem [#allocation9], 3
          %406 = sst [smem:[%s405]] 128
          %s407 = scalar_lea.smem [#allocation9], 4
          %408 = sst [smem:[%s407]] 128
          %s409 = scalar_lea.smem [#allocation9], 5
          %410 = sst [smem:[%s409]] 8
          %412 = dma.general %s392, 3072, %s394, %s369, [#allocation8], [#allocation9], %s390, 0
        $region32: #{tpu_custom_call.1} parent=23 // pred_fallthru
          _
      $region24: #{tpu_custom_call.1} parent=5 // pred_fallthru
        _
      %p413 = scmp.le.s32.totalorder 2, %s13
      // Predicated region
      $region33: #{tpu_custom_call.1} parent=5 // pred_check
        %p414 = pneg %p413
      $region34: #{tpu_custom_call.1} parent=5 // pred_check_branch
        %416 = sbr.rel (%p414) target = $region36
      $region35: #{tpu_custom_call.1} parent=5 // pred_region
        %s417 = ssub.s32 %s13, 2
        // Predicated region
        $region37: #{tpu_custom_call.1} parent=35 // pred_check
          %p418 = pneg %p68
        $region38: #{tpu_custom_call.1} parent=35 // pred_check_branch
          %420 = sbr.rel (%p418) target = $region40
        $region39: #{tpu_custom_call.1} parent=35 // pred_region
          %s421 = sand.u32 %s53, 1
          %s422 = scalar_lea.sflag [#allocation4], %s421
          %s423 = sand.u32 %s53, 1
          %s424 = smul.addr %s423, 192
          %s425 = scalar_lea.vmem [#allocation5], %s424
          %427 = dma.done %s422, 3072
        $region40: #{tpu_custom_call.1} parent=35 // pred_fallthru
          _
      $region36: #{tpu_custom_call.1} parent=5 // pred_fallthru
        _
    $region6: #{tpu_custom_call.1} parent=1 // loop_footer
      %s17 = sadd.s32 1, %s13
    $region7: #{tpu_custom_call.1} parent=1 // loop_footer_branch
      %12 = sbr.rel target = $region3
    $region8: #{tpu_custom_call.1} parent=1 // loop_exit
      _
    %428 = vsyncpa [#allocation3], 1
    %s429 = scalar_lea.sflag [#allocation3], 1
    %430 = vsyncpa %s429, 1
    %431 = vsyncpa [#allocation4], 1
    %s432 = scalar_lea.sflag [#allocation4], 1
    %433 = vsyncpa %s432, 1

</llo_original>
